<compile_context>
chip_gen: v5e
topology: v5e:2x2
jax: 0.10.0
libtpu: 0.0.40
codegen_flags: <defaults>
</compile_context>

<pallas_src>
import math
from functools import partial

import jax
import jax.numpy as jnp
from jax.experimental import pallas as pl
from jax.experimental.pallas import tpu as pltpu

_MiB = 1024 * 1024


# ---------------------------------------------------------------------------
# Kernel
# ---------------------------------------------------------------------------
def _cond_emb_kernel(pos_ref, inv_freq_ref, w1_ref, b1_ref, w2_ref, b2_ref,
                     out_ref, h_ref, *, range_min, range_max, half):
    # pos_ref:      [tn, 1]    f32
    # inv_freq_ref: [1, half]  f32
    # w1_ref:       [dim, dim] bf16  (pre-transposed: [in, out], resident)
    # b1_ref:       [1, dim]   f32
    # w2_ref:       [dim, tj]  bf16  (pre-transposed: [in, out], column tile)
    # b2_ref:       [1, tj]    f32
    # out_ref:      [tn, tj]
    # h_ref:        [tn, dim]  f32 VMEM scratch = SiLU(Linear1) activations
    #
    # INVARIANT: h_ref is written only at j == 0 and reused for every j; this
    # requires j to be the innermost, "arbitrary" grid axis (same core runs
    # all j for a given i).  Do NOT mark j "parallel" or reorder the grid.
    j = pl.program_id(1)

    @pl.when(j == 0)
    def _():
        pos = pos_ref[...]                                    # [tn, 1] f32
        if (range_min is not None) and (range_max is not None):
            pos = jnp.clip(pos, range_min, range_max)
            pos = (pos - range_min) * (1.0 / (range_max - range_min))
        ang = pos * inv_freq_ref[...]                         # [tn, half] f32 VPU
        sin_a = jnp.sin(ang).astype(jnp.bfloat16)             # MXU operands bf16
        cos_a = jnp.cos(ang).astype(jnp.bfloat16)
        # Split-K first Linear (no sin||cos lane concat); f32 MXU accumulation.
        h = jnp.dot(sin_a, w1_ref[:half, :], preferred_element_type=jnp.float32)
        h = h + jnp.dot(cos_a, w1_ref[half:, :], preferred_element_type=jnp.float32)
        h = h + b1_ref[...]                                   # f32 bias
        h_ref[...] = h * jax.nn.sigmoid(h)                    # SiLU, kept in f32

    # Second Linear on cached activations; cast to bf16 only at the MXU.
    out = jnp.dot(h_ref[...].astype(jnp.bfloat16), w2_ref[...],
                  preferred_element_type=jnp.float32)
    out_ref[...] = (out + b2_ref[...]).astype(out_ref.dtype)


# ---------------------------------------------------------------------------
# One-time parameter prep (init-time, not per call)
# ---------------------------------------------------------------------------
def prepare_params(inv_freq, w1, b1, w2, b2):
    """nn.Linear weights arrive as [out, in]; keep them transposed to
    [in, out] and in bf16 so the kernel does plain row-major MXU matmuls."""
    dim = w1.shape[0]
    assert dim % 2 == 0, "ContinuousConditionEmbedding requires even dim"
    half = dim // 2
    return dict(
        inv_freq=jnp.asarray(inv_freq, jnp.float32).reshape(1, half),
        w1_t=jnp.asarray(w1, jnp.float32).T.astype(jnp.bfloat16),   # [in, out]
        b1=jnp.asarray(b1, jnp.float32).reshape(1, dim),
        w2_t=jnp.asarray(w2, jnp.float32).T.astype(jnp.bfloat16),   # [in, out]
        b2=jnp.asarray(b2, jnp.float32).reshape(1, dim),
    )


# ---------------------------------------------------------------------------
# VMEM budget / tile selection
# ---------------------------------------------------------------------------
def _vmem_budget_bytes():
    """Per-generation VMEM budget with headroom for Mosaic internal scratch."""
    cap = None
    try:
        info = pltpu.get_tpu_info()
        for attr in ("vmem_capacity_bytes", "vmem_bytes", "vmem_size_bytes"):
            cap = getattr(info, attr, None)
            if cap:
                break
    except Exception:
        cap = None
    if cap is None:
        cap = 64 * _MiB                          # unknown -> conservative (v7x)
    if cap >= 128 * _MiB:                        # v5e / v6e
        return 100 * _MiB
    return max(int(cap) - 12 * _MiB, 32 * _MiB)  # v7x: ~52 MiB of 64 MiB


def _vmem_estimate(tn, tj, n_j, dim, half, out_bytes, single_buffer):
    w1_buf = 1 if single_buffer else 2
    w2_buf = 1 if (single_buffer and n_j == 1) else 2
    return (w1_buf * dim * dim * 2             # W1 bf16 (resident)
            + w2_buf * dim * tj * 2            # W2 column tiles bf16
            + 2 * tn * tj * out_bytes          # out tiles (pipelined)
            + tn * dim * 4                     # h scratch f32
            + 2 * tn * 4                       # pos tiles
            + w1_buf * (half + dim) * 4        # inv_freq + b1
            + w2_buf * tj * 4)                 # b2


def _divisor_candidates(extent, cands):
    out = [c for c in cands if c <= extent and extent % c == 0]
    if extent not in out:
        out.append(extent)                     # full extent is always legal
    return out


def _choose_tiles(n, dim, half, out_bytes, budget, single_buffer):
    tn_cands = _divisor_candidates(n, (2048, 1024, 512, 256, 128, 64, 32, 16, 8))
    tj_cands = [dim] + [c for c in (1024, 512, 256, 128) if c < dim and dim % c == 0]
    tn, tj = tn_cands[-1], tj_cands[-1]
    found = False
    for cand_tj in tj_cands:                   # prefer W2 fully resident (tj=dim)
        n_j = dim // cand_tj
        for cand_tn in tn_cands:               # then the largest row tile that fits
            if _vmem_estimate(cand_tn, cand_tj, n_j, dim, half, out_bytes,
                              single_buffer) <= budget:
                tn, tj, found = cand_tn, cand_tj, True
                break
        if found:
            break
    # v7x megacore: give the "parallel" i axis >= 2 steps when rows are plentiful.
    if n // tn == 1 and n % 16 == 0 and n // 2 >= 256:
        tn = n // 2
    return tn, tj


# ---------------------------------------------------------------------------
# Wrapper
# ---------------------------------------------------------------------------
def continuous_condition_embedding(pos, params, range_min=None, range_max=None,
                                   *, tile_n=None, tile_j=None,
                                   out_dtype=jnp.float32):
    """pos: [N] float32.  params: output of prepare_params.  Returns [N, dim]."""
    # Mirror the PyTorch __init__ range fixup.
    if (range_min is not None) and (range_max is not None) and (
            range_min >= range_max - 1e-6):
        range_max = range_min + 1.0

    inv_freq = params["inv_freq"]
    w1_t, b1 = params["w1_t"], params["b1"]
    w2_t, b2 = params["w2_t"], params["b2"]

    n = pos.shape[0]
    dim = w1_t.shape[0]
    half = dim // 2
    out_bytes = jnp.dtype(out_dtype).itemsize

    pos2d = pos.reshape(n, 1).astype(jnp.float32)
    budget = _vmem_budget_bytes()

    def _spec(shape, imap, mode=None):
        if mode is None:
            return pl.BlockSpec(shape, imap)
        return pl.BlockSpec(shape, imap, pipeline_mode=mode)

    def build(single_buffer):
        tn, tj = _choose_tiles(n, dim, half, out_bytes, budget, single_buffer)
        if tile_n is not None:
            tn = tile_n
        if tile_j is not None:
            tj = tile_j
        assert n % tn == 0 and dim % tj == 0
        n_i, n_j = n // tn, dim // tj

        const_mode = pl.Buffered(1) if single_buffer else None
        w2_mode = pl.Buffered(1) if (single_buffer and n_j == 1) else None

        kernel = partial(_cond_emb_kernel, range_min=range_min,
                         range_max=range_max, half=half)

        vmem_limit = int(min(
            max(2 * _vmem_estimate(tn, tj, n_j, dim, half, out_bytes,
                                   single_buffer), 16 * _MiB),
            budget))

        cost = pl.CostEstimate(
            flops=4 * n * dim * dim,                       # both Linears
            transcendentals=n * (2 * half + dim),          # sin, cos, sigmoid
            bytes_accessed=(2 * dim * dim * 2              # W1 + W2 (bf16)
                            + (half + 2 * dim) * 4         # inv_freq + biases
                            + n * (dim * out_bytes + 4)))  # out + pos

        return pl.pallas_call(
            kernel,
            out_shape=jax.ShapeDtypeStruct((n, dim), out_dtype),
            grid=(n_i, n_j),
            in_specs=[
                _spec((tn, 1), lambda i, j: (i, 0)),                    # pos
                _spec((1, half), lambda i, j: (0, 0), const_mode),      # inv_freq
                _spec((dim, dim), lambda i, j: (0, 0), const_mode),     # W1
                _spec((1, dim), lambda i, j: (0, 0), const_mode),       # b1
                _spec((dim, tj), lambda i, j: (0, j), w2_mode),         # W2 tile
                _spec((1, tj), lambda i, j: (0, j), w2_mode),           # b2 tile
            ],
            out_specs=pl.BlockSpec((tn, tj), lambda i, j: (i, j)),
            scratch_shapes=[pltpu.VMEM((tn, dim), jnp.float32)],        # h (f32)
            compiler_params=pltpu.CompilerParams(
                # i "parallel" (megacore); j MUST stay "arbitrary" (h scratch).
                dimension_semantics=("parallel", "arbitrary"),
                vmem_limit_bytes=vmem_limit),
            cost_estimate=cost,
        )

    try:
        return build(True)(pos2d, inv_freq, w1_t, b1, w2_t, b2)
    except Exception:
        # Fallback if pl.Buffered(1)/pipeline_mode is rejected by this JAX.
        return build(False)(pos2d, inv_freq, w1_t, b1, w2_t, b2)


# ---------------------------------------------------------------------------
# Pure-JAX reference (mirrors the PyTorch module)
# ---------------------------------------------------------------------------
def _reference(pos, inv_freq, w1, b1, w2, b2, range_min, range_max):
    if (range_min is not None) and (range_max is not None):
        if range_min >= range_max - 1e-6:
            range_max = range_min + 1.0
        pos = jnp.clip(pos, range_min, range_max)
        pos = (pos - range_min) / (range_max - range_min)
    ang = pos[:, None] * inv_freq[None, :]
    emb = jnp.concatenate([jnp.sin(ang), jnp.cos(ang)], axis=-1)
    h = emb @ w1.T + b1
    h = h * jax.nn.sigmoid(h)
    return h @ w2.T + b2


if __name__ == "__main__":
    key = jax.random.PRNGKey(0)
    (k_pos, k_w1, k_b1, k_w2, k_b2,
     k_pos2, k_w1b, k_b1b, k_w2b, k_b2b) = jax.random.split(key, 10)

    MAX_T = 10000
    RANGE_MIN, RANGE_MAX = 0.0, 4.0

    # ---- test 1: module-sized demo (N=8, dim=32), single-block grid --------
    N, DIM = 8, 32
    half = DIM // 2
    freq_seq = jnp.arange(half, dtype=jnp.float32) / half
    inv_freq = jnp.exp(-math.log(MAX_T) * freq_seq)
    w1 = jax.random.normal(k_w1, (DIM, DIM), jnp.float32) * 0.1
    b1 = jax.random.normal(k_b1, (DIM,), jnp.float32) * 0.1
    w2 = jax.random.normal(k_w2, (DIM, DIM), jnp.float32) * 0.1
    b2 = jax.random.normal(k_b2, (DIM,), jnp.float32) * 0.1
    pos = jax.random.uniform(k_pos, (N,), jnp.float32, minval=-1.0, maxval=6.0)

    params = prepare_params(inv_freq, w1, b1, w2, b2)   # one-time init-time prep
    out = continuous_condition_embedding(pos, params, RANGE_MIN, RANGE_MAX)
    out = jax.block_until_ready(out)
    ref = _reference(pos, inv_freq, w1, b1, w2, b2, RANGE_MIN, RANGE_MAX)
    assert out.shape == (N, DIM)
    err = float(jnp.max(jnp.abs(out - ref)))
    assert jnp.allclose(out, ref, atol=3e-2, rtol=3e-2), err  # bf16 weights

    # ---- test 2: exercise the tiled path (grid = (2, 2), h-scratch reuse) --
    N2, DIM2 = 16, 256
    half2 = DIM2 // 2
    freq_seq2 = jnp.arange(half2, dtype=jnp.float32) / half2
    inv_freq2 = jnp.exp(-math.log(MAX_T) * freq_seq2)
    w1b = jax.random.normal(k_w1b, (DIM2, DIM2), jnp.float32) * 0.05
    b1b = jax.random.normal(k_b1b, (DIM2,), jnp.float32) * 0.05
    w2b = jax.random.normal(k_w2b, (DIM2, DIM2), jnp.float32) * 0.05
    b2b = jax.random.normal(k_b2b, (DIM2,), jnp.float32) * 0.05
    pos2 = jax.random.uniform(k_pos2, (N2,), jnp.float32, minval=-1.0, maxval=6.0)

    params2 = prepare_params(inv_freq2, w1b, b1b, w2b, b2b)
    out2 = continuous_condition_embedding(pos2, params2, RANGE_MIN, RANGE_MAX,
                                          tile_n=8, tile_j=128)
    out2 = jax.block_until_ready(out2)
    ref2 = _reference(pos2, inv_freq2, w1b, b1b, w2b, b2b, RANGE_MIN, RANGE_MAX)
    assert out2.shape == (N2, DIM2)
    err2 = float(jnp.max(jnp.abs(out2 - ref2)))
    assert jnp.allclose(out2, ref2, atol=3e-2, rtol=3e-2), err2

    # ---- test 3: auto-tiled path (tj = dim, W2 resident, single-buffered) --
    out3 = continuous_condition_embedding(pos2, params2, RANGE_MIN, RANGE_MAX,
                                          out_dtype=jnp.float32)
    out3 = jax.block_until_ready(out3)
    err3 = float(jnp.max(jnp.abs(out3 - ref2)))
    assert jnp.allclose(out3, ref2, atol=3e-2, rtol=3e-2), err3

    print("KERNEL_OK")
</pallas_src>

<mosaic_0001>
module attributes {stable_mosaic.version = 11 : i64} {
  func.func @_cond_emb_kernel(%arg0: i32, %arg1: i32, %arg2: memref<8x1xf32, #tpu.memory_space<vmem>>, %arg3: memref<1x16xf32, #tpu.memory_space<vmem>>, %arg4: memref<32x32xbf16, #tpu.memory_space<vmem>>, %arg5: memref<1x32xf32, #tpu.memory_space<vmem>>, %arg6: memref<32x32xbf16, #tpu.memory_space<vmem>>, %arg7: memref<1x32xf32, #tpu.memory_space<vmem>>, %arg8: memref<8x32xf32, #tpu.memory_space<vmem>>, %arg9: memref<8x32xf32, #tpu.memory_space<vmem>>) attributes {dimension_semantics = [#tpu.dimension_semantics<parallel>, #tpu.dimension_semantics<arbitrary>], iteration_bounds = array<i64: 1, 1>, scalar_prefetch = 0 : i64, scratch_operands = 1 : i64, tpu.core_type = #tpu.core_type<tc>, window_params = [{transform_indices = @transform_0, window_bounds = array<i64: 8, 1>}, {pipeline_mode = #tpu.pipeline_mode<synchronous>, transform_indices = @transform_1, window_bounds = array<i64: 1, 16>}, {pipeline_mode = #tpu.pipeline_mode<synchronous>, transform_indices = @transform_2, window_bounds = array<i64: 32, 32>}, {pipeline_mode = #tpu.pipeline_mode<synchronous>, transform_indices = @transform_3, window_bounds = array<i64: 1, 32>}, {pipeline_mode = #tpu.pipeline_mode<synchronous>, transform_indices = @transform_4, window_bounds = array<i64: 32, 32>}, {pipeline_mode = #tpu.pipeline_mode<synchronous>, transform_indices = @transform_5, window_bounds = array<i64: 1, 32>}, {transform_indices = @transform_6, window_bounds = array<i64: 8, 32>}]} {
    %c0_i32 = arith.constant 0 : i32
    %0 = arith.cmpi eq, %arg1, %c0_i32 : i32
    %1 = arith.extui %0 : i1 to i32
    %c0_i32_0 = arith.constant 0 : i32
    %2 = arith.cmpi ne, %1, %c0_i32_0 : i32
    scf.if %2 {
      %c0_8 = arith.constant 0 : index
      %c0_9 = arith.constant 0 : index
      %11 = vector.load %arg2[%c0_8, %c0_9] : memref<8x1xf32, #tpu.memory_space<vmem>>, vector<8x1xf32>
      %cst_10 = arith.constant 0.000000e+00 : f32
      %cst_11 = arith.constant 4.000000e+00 : f32
      %12 = vector.broadcast %cst_10 : f32 to vector<8x1xf32>
      %13 = arith.maximumf %12, %11 : vector<8x1xf32>
      %14 = vector.broadcast %cst_11 : f32 to vector<8x1xf32>
      %15 = arith.minimumf %14, %13 : vector<8x1xf32>
      %cst_12 = arith.constant 0.000000e+00 : f32
      %16 = vector.broadcast %cst_12 : f32 to vector<8x1xf32>
      %17 = arith.subf %15, %16 : vector<8x1xf32>
      %cst_13 = arith.constant 2.500000e-01 : f32
      %18 = vector.broadcast %cst_13 : f32 to vector<8x1xf32>
      %19 = arith.mulf %17, %18 : vector<8x1xf32>
      %c0_14 = arith.constant 0 : index
      %c0_15 = arith.constant 0 : index
      %20 = vector.load %arg3[%c0_14, %c0_15] : memref<1x16xf32, #tpu.memory_space<vmem>>, vector<1x16xf32>
      %21 = vector.broadcast %19 : vector<8x1xf32> to vector<8x16xf32>
      %22 = vector.broadcast %20 : vector<1x16xf32> to vector<8x16xf32>
      %23 = arith.mulf %21, %22 : vector<8x16xf32>
      %24 = math.sin %23 : vector<8x16xf32>
      %25 = arith.truncf %24 : vector<8x16xf32> to vector<8x16xbf16>
      %26 = math.cos %23 : vector<8x16xf32>
      %27 = arith.truncf %26 : vector<8x16xf32> to vector<8x16xbf16>
      %c0_16 = arith.constant 0 : index
      %c0_17 = arith.constant 0 : index
      %28 = vector.load %arg4[%c0_16, %c0_17] : memref<32x32xbf16, #tpu.memory_space<vmem>>, vector<16x32xbf16>
      %cst_18 = arith.constant dense<0.000000e+00> : vector<8x32xf32>
      %29 = tpu.matmul %25, %28, %cst_18 {dimension_numbers = #tpu.dot_dimension_numbers<[1], [0], [0], [1], [0, 0, 1, 1], [], []>} : vector<8x16xbf16>, vector<16x32xbf16>, vector<8x32xf32> -> vector<8x32xf32>
      %c16 = arith.constant 16 : index
      %c0_19 = arith.constant 0 : index
      %30 = vector.load %arg4[%c16, %c0_19] : memref<32x32xbf16, #tpu.memory_space<vmem>>, vector<16x32xbf16>
      %cst_20 = arith.constant dense<0.000000e+00> : vector<8x32xf32>
      %31 = tpu.matmul %27, %30, %cst_20 {dimension_numbers = #tpu.dot_dimension_numbers<[1], [0], [0], [1], [0, 0, 1, 1], [], []>} : vector<8x16xbf16>, vector<16x32xbf16>, vector<8x32xf32> -> vector<8x32xf32>
      %32 = arith.addf %29, %31 : vector<8x32xf32>
      %c0_21 = arith.constant 0 : index
      %c0_22 = arith.constant 0 : index
      %33 = vector.load %arg5[%c0_21, %c0_22] : memref<1x32xf32, #tpu.memory_space<vmem>>, vector<1x32xf32>
      %34 = vector.broadcast %33 : vector<1x32xf32> to vector<8x32xf32>
      %35 = arith.addf %32, %34 : vector<8x32xf32>
      %36 = arith.negf %35 : vector<8x32xf32>
      %37 = math.exp %36 : vector<8x32xf32>
      %cst_23 = arith.constant 1.000000e+00 : f32
      %38 = vector.broadcast %cst_23 : f32 to vector<8x32xf32>
      %39 = arith.addf %38, %37 : vector<8x32xf32>
      %40 = arith.divf %38, %39 : vector<8x32xf32>
      %41 = arith.mulf %35, %40 : vector<8x32xf32>
      %c0_24 = arith.constant 0 : index
      %c0_25 = arith.constant 0 : index
      %42 = vector.load %arg9[%c0_24, %c0_25] : memref<8x32xf32, #tpu.memory_space<vmem>>, vector<8x32xf32>
      tpu.vector_store %arg9[%c0_24, %c0_25], %41 {strides = array<i32>} : memref<8x32xf32, #tpu.memory_space<vmem>>, vector<8x32xf32>,
    } else {
    }
    %c0 = arith.constant 0 : index
    %c0_1 = arith.constant 0 : index
    %3 = vector.load %arg9[%c0, %c0_1] : memref<8x32xf32, #tpu.memory_space<vmem>>, vector<8x32xf32>
    %4 = arith.truncf %3 : vector<8x32xf32> to vector<8x32xbf16>
    %c0_2 = arith.constant 0 : index
    %c0_3 = arith.constant 0 : index
    %5 = vector.load %arg6[%c0_2, %c0_3] : memref<32x32xbf16, #tpu.memory_space<vmem>>, vector<32x32xbf16>
    %cst = arith.constant dense<0.000000e+00> : vector<8x32xf32>
    %6 = tpu.matmul %4, %5, %cst {dimension_numbers = #tpu.dot_dimension_numbers<[1], [0], [0], [1], [0, 0, 1, 1], [], []>} : vector<8x32xbf16>, vector<32x32xbf16>, vector<8x32xf32> -> vector<8x32xf32>
    %c0_4 = arith.constant 0 : index
    %c0_5 = arith.constant 0 : index
    %7 = vector.load %arg7[%c0_4, %c0_5] : memref<1x32xf32, #tpu.memory_space<vmem>>, vector<1x32xf32>
    %8 = vector.broadcast %7 : vector<1x32xf32> to vector<8x32xf32>
    %9 = arith.addf %6, %8 : vector<8x32xf32>
    %c0_6 = arith.constant 0 : index
    %c0_7 = arith.constant 0 : index
    %10 = vector.load %arg8[%c0_6, %c0_7] : memref<8x32xf32, #tpu.memory_space<vmem>>, vector<8x32xf32>
    tpu.vector_store %arg8[%c0_6, %c0_7], %9 {strides = array<i32>} : memref<8x32xf32, #tpu.memory_space<vmem>>, vector<8x32xf32>,
    return
  }
  func.func @transform_0(%arg0: i32, %arg1: i32) -> (i32, i32) {
    %c0_i32 = arith.constant 0 : i32
    %c0_i32_0 = arith.constant 0 : i32
    return %arg0, %c0_i32 : i32, i32
  }
  func.func @transform_1(%arg0: i32, %arg1: i32) -> (i32, i32) {
    %c0_i32 = arith.constant 0 : i32
    %c0_i32_0 = arith.constant 0 : i32
    %c0_i32_1 = arith.constant 0 : i32
    return %c0_i32, %c0_i32_0 : i32, i32
  }
  func.func @transform_2(%arg0: i32, %arg1: i32) -> (i32, i32) {
    %c0_i32 = arith.constant 0 : i32
    %c0_i32_0 = arith.constant 0 : i32
    %c0_i32_1 = arith.constant 0 : i32
    return %c0_i32, %c0_i32_0 : i32, i32
  }
  func.func @transform_3(%arg0: i32, %arg1: i32) -> (i32, i32) {
    %c0_i32 = arith.constant 0 : i32
    %c0_i32_0 = arith.constant 0 : i32
    %c0_i32_1 = arith.constant 0 : i32
    return %c0_i32, %c0_i32_0 : i32, i32
  }
  func.func @transform_4(%arg0: i32, %arg1: i32) -> (i32, i32) {
    %c0_i32 = arith.constant 0 : i32
    %c0_i32_0 = arith.constant 0 : i32
    return %c0_i32, %arg1 : i32, i32
  }
  func.func @transform_5(%arg0: i32, %arg1: i32) -> (i32, i32) {
    %c0_i32 = arith.constant 0 : i32
    %c0_i32_0 = arith.constant 0 : i32
    return %c0_i32, %arg1 : i32, i32
  }
  func.func @transform_6(%arg0: i32, %arg1: i32) -> (i32, i32) {
    %c0_i32 = arith.constant 0 : i32
    return %arg0, %arg1 : i32, i32
  }
}

module attributes {stable_mosaic.version = 11 : i64} {
  func.func @_cond_emb_kernel(%arg0: i32, %arg1: i32, %arg2: memref<8x1xf32, #tpu.memory_space<vmem>>, %arg3: memref<1x16xf32, #tpu.memory_space<vmem>>, %arg4: memref<32x32xbf16, #tpu.memory_space<vmem>>, %arg5: memref<1x32xf32, #tpu.memory_space<vmem>>, %arg6: memref<32x32xbf16, #tpu.memory_space<vmem>>, %arg7: memref<1x32xf32, #tpu.memory_space<vmem>>, %arg8: memref<8x32xf32, #tpu.memory_space<vmem>>, %arg9: memref<8x32xf32, #tpu.memory_space<vmem>>) attributes {dimension_semantics = [#tpu.dimension_semantics<parallel>, #tpu.dimension_semantics<arbitrary>], iteration_bounds = array<i64: 1, 1>, scalar_prefetch = 0 : i64, scratch_operands = 1 : i64, tpu.core_type = #tpu.core_type<tc>, window_params = [{transform_indices = @transform_0, window_bounds = array<i64: 8, 1>}, {pipeline_mode = #tpu.pipeline_mode<synchronous>, transform_indices = @transform_1, window_bounds = array<i64: 1, 16>}, {pipeline_mode = #tpu.pipeline_mode<synchronous>, transform_indices = @transform_2, window_bounds = array<i64: 32, 32>}, {pipeline_mode = #tpu.pipeline_mode<synchronous>, transform_indices = @transform_3, window_bounds = array<i64: 1, 32>}, {transform_indices = @transform_4, window_bounds = array<i64: 32, 32>}, {transform_indices = @transform_5, window_bounds = array<i64: 1, 32>}, {transform_indices = @transform_6, window_bounds = array<i64: 8, 32>}]} {
    %c0_i32 = arith.constant 0 : i32
    %0 = arith.cmpi eq, %arg1, %c0_i32 : i32
    %1 = arith.extui %0 : i1 to i32
    %c0_i32_0 = arith.constant 0 : i32
    %2 = arith.cmpi ne, %1, %c0_i32_0 : i32
    scf.if %2 {
      %c0_8 = arith.constant 0 : index
      %c0_9 = arith.constant 0 : index
      %11 = vector.load %arg2[%c0_8, %c0_9] : memref<8x1xf32, #tpu.memory_space<vmem>>, vector<8x1xf32>
      %cst_10 = arith.constant 0.000000e+00 : f32
      %cst_11 = arith.constant 4.000000e+00 : f32
      %12 = vector.broadcast %cst_10 : f32 to vector<8x1xf32>
      %13 = arith.maximumf %12, %11 : vector<8x1xf32>
      %14 = vector.broadcast %cst_11 : f32 to vector<8x1xf32>
      %15 = arith.minimumf %14, %13 : vector<8x1xf32>
      %cst_12 = arith.constant 0.000000e+00 : f32
      %16 = vector.broadcast %cst_12 : f32 to vector<8x1xf32>
      %17 = arith.subf %15, %16 : vector<8x1xf32>
      %cst_13 = arith.constant 2.500000e-01 : f32
      %18 = vector.broadcast %cst_13 : f32 to vector<8x1xf32>
      %19 = arith.mulf %17, %18 : vector<8x1xf32>
      %c0_14 = arith.constant 0 : index
      %c0_15 = arith.constant 0 : index
      %20 = vector.load %arg3[%c0_14, %c0_15] : memref<1x16xf32, #tpu.memory_space<vmem>>, vector<1x16xf32>
      %21 = vector.broadcast %19 : vector<8x1xf32> to vector<8x16xf32>
      %22 = vector.broadcast %20 : vector<1x16xf32> to vector<8x16xf32>
      %23 = arith.mulf %21, %22 : vector<8x16xf32>
      %24 = math.sin %23 : vector<8x16xf32>
      %25 = arith.truncf %24 : vector<8x16xf32> to vector<8x16xbf16>
      %26 = math.cos %23 : vector<8x16xf32>
      %27 = arith.truncf %26 : vector<8x16xf32> to vector<8x16xbf16>
      %c0_16 = arith.constant 0 : index
      %c0_17 = arith.constant 0 : index
      %28 = vector.load %arg4[%c0_16, %c0_17] : memref<32x32xbf16, #tpu.memory_space<vmem>>, vector<16x32xbf16>
      %cst_18 = arith.constant dense<0.000000e+00> : vector<8x32xf32>
      %29 = tpu.matmul %25, %28, %cst_18 {dimension_numbers = #tpu.dot_dimension_numbers<[1], [0], [0], [1], [0, 0, 1, 1], [], []>} : vector<8x16xbf16>, vector<16x32xbf16>, vector<8x32xf32> -> vector<8x32xf32>
      %c16 = arith.constant 16 : index
      %c0_19 = arith.constant 0 : index
      %30 = vector.load %arg4[%c16, %c0_19] : memref<32x32xbf16, #tpu.memory_space<vmem>>, vector<16x32xbf16>
      %cst_20 = arith.constant dense<0.000000e+00> : vector<8x32xf32>
      %31 = tpu.matmul %27, %30, %cst_20 {dimension_numbers = #tpu.dot_dimension_numbers<[1], [0], [0], [1], [0, 0, 1, 1], [], []>} : vector<8x16xbf16>, vector<16x32xbf16>, vector<8x32xf32> -> vector<8x32xf32>
      %32 = arith.addf %29, %31 : vector<8x32xf32>
      %c0_21 = arith.constant 0 : index
      %c0_22 = arith.constant 0 : index
      %33 = vector.load %arg5[%c0_21, %c0_22] : memref<1x32xf32, #tpu.memory_space<vmem>>, vector<1x32xf32>
      %34 = vector.broadcast %33 : vector<1x32xf32> to vector<8x32xf32>
      %35 = arith.addf %32, %34 : vector<8x32xf32>
      %36 = arith.negf %35 : vector<8x32xf32>
      %37 = math.exp %36 : vector<8x32xf32>
      %cst_23 = arith.constant 1.000000e+00 : f32
      %38 = vector.broadcast %cst_23 : f32 to vector<8x32xf32>
      %39 = arith.addf %38, %37 : vector<8x32xf32>
      %40 = arith.divf %38, %39 : vector<8x32xf32>
      %41 = arith.mulf %35, %40 : vector<8x32xf32>
      %c0_24 = arith.constant 0 : index
      %c0_25 = arith.constant 0 : index
      %42 = vector.load %arg9[%c0_24, %c0_25] : memref<8x32xf32, #tpu.memory_space<vmem>>, vector<8x32xf32>
      tpu.vector_store %arg9[%c0_24, %c0_25], %41 {strides = array<i32>} : memref<8x32xf32, #tpu.memory_space<vmem>>, vector<8x32xf32>,
    } else {
    }
    %c0 = arith.constant 0 : index
    %c0_1 = arith.constant 0 : index
    %3 = vector.load %arg9[%c0, %c0_1] : memref<8x32xf32, #tpu.memory_space<vmem>>, vector<8x32xf32>
    %4 = arith.truncf %3 : vector<8x32xf32> to vector<8x32xbf16>
    %c0_2 = arith.constant 0 : index
    %c0_3 = arith.constant 0 : index
    %5 = vector.load %arg6[%c0_2, %c0_3] : memref<32x32xbf16, #tpu.memory_space<vmem>>, vector<32x32xbf16>
    %cst = arith.constant dense<0.000000e+00> : vector<8x32xf32>
    %6 = tpu.matmul %4, %5, %cst {dimension_numbers = #tpu.dot_dimension_numbers<[1], [0], [0], [1], [0, 0, 1, 1], [], []>} : vector<8x32xbf16>, vector<32x32xbf16>, vector<8x32xf32> -> vector<8x32xf32>
    %c0_4 = arith.constant 0 : index
    %c0_5 = arith.constant 0 : index
    %7 = vector.load %arg7[%c0_4, %c0_5] : memref<1x32xf32, #tpu.memory_space<vmem>>, vector<1x32xf32>
    %8 = vector.broadcast %7 : vector<1x32xf32> to vector<8x32xf32>
    %9 = arith.addf %6, %8 : vector<8x32xf32>
    %c0_6 = arith.constant 0 : index
    %c0_7 = arith.constant 0 : index
    %10 = vector.load %arg8[%c0_6, %c0_7] : memref<8x32xf32, #tpu.memory_space<vmem>>, vector<8x32xf32>
    tpu.vector_store %arg8[%c0_6, %c0_7], %9 {strides = array<i32>} : memref<8x32xf32, #tpu.memory_space<vmem>>, vector<8x32xf32>,
    return
  }
  func.func @transform_0(%arg0: i32, %arg1: i32) -> (i32, i32) {
    %c0_i32 = arith.constant 0 : i32
    %c0_i32_0 = arith.constant 0 : i32
    return %arg0, %c0_i32 : i32, i32
  }
  func.func @transform_1(%arg0: i32, %arg1: i32) -> (i32, i32) {
    %c0_i32 = arith.constant 0 : i32
    %c0_i32_0 = arith.constant 0 : i32
    %c0_i32_1 = arith.constant 0 : i32
    return %c0_i32, %c0_i32_0 : i32, i32
  }
  func.func @transform_2(%arg0: i32, %arg1: i32) -> (i32, i32) {
    %c0_i32 = arith.constant 0 : i32
    %c0_i32_0 = arith.constant 0 : i32
    %c0_i32_1 = arith.constant 0 : i32
    return %c0_i32, %c0_i32_0 : i32, i32
  }
  func.func @transform_3(%arg0: i32, %arg1: i32) -> (i32, i32) {
    %c0_i32 = arith.constant 0 : i32
    %c0_i32_0 = arith.constant 0 : i32
    %c0_i32_1 = arith.constant 0 : i32
    return %c0_i32, %c0_i32_0 : i32, i32
  }
  func.func @transform_4(%arg0: i32, %arg1: i32) -> (i32, i32) {
    %c0_i32 = arith.constant 0 : i32
    %c0_i32_0 = arith.constant 0 : i32
    return %c0_i32, %arg1 : i32, i32
  }
  func.func @transform_5(%arg0: i32, %arg1: i32) -> (i32, i32) {
    %c0_i32 = arith.constant 0 : i32
    %c0_i32_0 = arith.constant 0 : i32
    return %c0_i32, %arg1 : i32, i32
  }
  func.func @transform_6(%arg0: i32, %arg1: i32) -> (i32, i32) {
    %c0_i32 = arith.constant 0 : i32
    return %arg0, %arg1 : i32, i32
  }
}

</mosaic_0001>

<llo_original>
// kernel: tpu_custom_call.1
$region0: #{tpu_custom_call.1}
  #allocation0 [shape = 'u32[]', space=smem, size = 0x4, offset = 0x4, fixed_abs, tag = 'smem constant byte address 0x4 - core index']
  #allocation1 [shape = 'u32[72,128]{1,0:T(1,128)}', space=vmem, size = 0x9000, scoped, tag = 'internal scratch']
  #allocation2 [shape = 'f32[8,32]{1,0:T(8,128)}', space=vmem, size = 0x1000, scoped, tag = 'scratch operand']
  %s0 = inlined_call_operand.vmem [shape: f32[8,1], index: 0, kind: input, shape index: {}]
  %s1 = inlined_call_operand.vmem [shape: f32[1,16], index: 1, kind: input, shape index: {}]
  %s2 = inlined_call_operand.hbm [shape: bf16[32,32], index: 2, kind: input, shape index: {}]
  %s3 = inlined_call_operand.vmem [shape: f32[1,32], index: 3, kind: input, shape index: {}]
  %s4 = inlined_call_operand.hbm [shape: bf16[32,32], index: 4, kind: input, shape index: {}]
  %s5 = inlined_call_operand.vmem [shape: f32[1,32], index: 5, kind: input, shape index: {}]
  %s6 = inlined_call_operand.hbm [shape: f32[8,32], index: 6, kind: output, shape index: {}]
  %s7 = sld [smem:[#allocation0]]
  $region46: #{tpu_custom_call.1} parent=0
    _
  %s9 = ssub.s32 1, %s7
  %s10 = scalar_select 0, %s9, %s7
  $region1: #{tpu_custom_call.1} parent=0
    #allocation3 [shape = 'u8[8192]{0}', space=vmem, size = 0x2000, scoped, tag = 'input window, operand 2, single buffered']
    #allocation4 [shape = 's32[1]{0}', space=sflag, size = 0x4, scoped, tag = 'scoped memory for tpu_custom_call.1']
    #allocation5 [shape = 's32[1]{0}', space=sflag, size = 0x4, scoped, tag = 'scoped memory for tpu_custom_call.1']
    #allocation6 [shape = 'u8[8192]{0}', space=vmem, size = 0x2000, scoped, tag = 'input window, operand 4, single buffered']
    #allocation7 [shape = 's32[1]{0}', space=sflag, size = 0x4, scoped, tag = 'scoped memory for tpu_custom_call.1']
    #allocation8 [shape = 'u8[4096]{0}', space=vmem, size = 0x1000, scoped, tag = 'output window, operand 0, single buffered']
    %11 = vsyncpa [#allocation4], 0
    %12 = vsyncpa [#allocation7], 0
    %13 = vsyncpa [#allocation5], 0
    // Predicated region
    $region2: #{tpu_custom_call.1} parent=1 // pred_check
      _
    $region3: #{tpu_custom_call.1} parent=1 // pred_check_branch
      %15 = sbr.rel (0) target = $region5
    $region4: #{tpu_custom_call.1} parent=1 // pred_region
      _
    $region5: #{tpu_custom_call.1} parent=1 // pred_fallthru
      _
    // Predicated region
    $region6: #{tpu_custom_call.1} parent=1 // pred_check
      _
    $region7: #{tpu_custom_call.1} parent=1 // pred_check_branch
      %17 = sbr.rel (0) target = $region9
    $region8: #{tpu_custom_call.1} parent=1 // pred_region
      _
    $region9: #{tpu_custom_call.1} parent=1 // pred_fallthru
      _
    // Predicated region
    $region10: #{tpu_custom_call.1} parent=1 // pred_check
      _
    $region11: #{tpu_custom_call.1} parent=1 // pred_check_branch
      %19 = sbr.rel (0) target = $region13
    $region12: #{tpu_custom_call.1} parent=1 // pred_region
      %21 = vsyncadd [#allocation4], 0
      %s22 = sshll.u32 %s2, 4
      %s23 = int_to_ptr.hbm [resolvable:$true] %s22
      %s24 = sshll.u32 [#allocation3], 4
      %s25 = int_to_ptr.vmem [resolvable:$true] %s24
      %30 = dma.hbm_to_vmem [thread:$0]  %s23, 256, %s25, [#allocation4], 64, 64, 4
    $region13: #{tpu_custom_call.1} parent=1 // pred_fallthru
      _
    // Predicated region
    $region14: #{tpu_custom_call.1} parent=1 // pred_check
      _
    $region15: #{tpu_custom_call.1} parent=1 // pred_check_branch
      %32 = sbr.rel (0) target = $region17
    $region16: #{tpu_custom_call.1} parent=1 // pred_region
      _
    $region17: #{tpu_custom_call.1} parent=1 // pred_fallthru
      _
    // Predicated region
    $region18: #{tpu_custom_call.1} parent=1 // pred_check
      _
    $region19: #{tpu_custom_call.1} parent=1 // pred_check_branch
      %34 = sbr.rel (0) target = $region21
    $region20: #{tpu_custom_call.1} parent=1 // pred_region
      %36 = vsyncadd [#allocation7], 0
      %s37 = sshll.u32 %s4, 4
      %s38 = int_to_ptr.hbm [resolvable:$true] %s37
      %s39 = sshll.u32 [#allocation6], 4
      %s40 = int_to_ptr.vmem [resolvable:$true] %s39
      %45 = dma.hbm_to_vmem [thread:$0]  %s38, 256, %s40, [#allocation7], 64, 64, 4
    $region21: #{tpu_custom_call.1} parent=1 // pred_fallthru
      _
    // Predicated region
    $region22: #{tpu_custom_call.1} parent=1 // pred_check
      _
    $region23: #{tpu_custom_call.1} parent=1 // pred_check_branch
      %47 = sbr.rel (0) target = $region25
    $region24: #{tpu_custom_call.1} parent=1 // pred_region
      _
    $region25: #{tpu_custom_call.1} parent=1 // pred_fallthru
      _
    // Predicated region
    $region26: #{tpu_custom_call.1} parent=1 // pred_check
      _
    $region27: #{tpu_custom_call.1} parent=1 // pred_check_branch
      %49 = sbr.rel (0) target = $region29
    $region28: #{tpu_custom_call.1} parent=1 // pred_region
      %51 = dma.done [#allocation4], 256
    $region29: #{tpu_custom_call.1} parent=1 // pred_fallthru
      _
    // Predicated region
    $region30: #{tpu_custom_call.1} parent=1 // pred_check
      _
    $region31: #{tpu_custom_call.1} parent=1 // pred_check_branch
      %53 = sbr.rel (0) target = $region33
    $region32: #{tpu_custom_call.1} parent=1 // pred_region
      %55 = dma.done [#allocation7], 256
    $region33: #{tpu_custom_call.1} parent=1 // pred_fallthru
      _
    %p57 = scmp.eq.s32.totalorder 0, 0
    // Predicated region
    $region34: #{tpu_custom_call.1} parent=1 // pred_check
      %p58 = pneg %p57
    $region35: #{tpu_custom_call.1} parent=1 // pred_check_branch
      %60 = sbr.rel (%p58) target = $region37
    $region36: #{tpu_custom_call.1} parent=1 // pred_region
      %v61 = vld [vmem:[%s0] sm:$0xff]
      %v62 = vmax.f32 %v61, 0.0
      %v63 = vmin.f32 %v62, 4.0
      %v64 = vmul.f32 %v63, 0.25
      %v65 = vld [vmem:[%s1] sm:$0x1]
      %67 = vset.pattern.permute.xlu0 0
      %68 = vperm.xlu0 %67, %v64
      %v69 = vpop.permute.xlu0 %68
      %v72 = vperm.slane %v65, 0
      %v74 = vmul.f32 %v69, %v72
      %v75 = vand.u32 2147483647, %v74
      %vm76 = vcmp.le.f32.partialorder %v75, 0.7853982
      %vm77 = vcmp.lt.s32.totalorder %v74, 0
      %v78 = vand.u32 %v74, 2139095040
      %v79 = vshrl.u32 %v78, 23
      %v80 = vsub.s32 %v79, 127
      %v81 = vand.u32 2147483647, %v74
      %v82 = vand.u32 %v81, 8388607
      %v83 = vor.u32 %v82, 8388608
      %v84 = vsub.s32 0, %v83
      %v85 = vadd.s32 %v80, 1
      %vm86 = vcmp.gt.s32.totalorder %v85, 0
      %v87 = vsel %vm86, %v85, 0
      %v88 = vshrl.u32 %v87, 5
      %v89 = vand.u32 %v87, 31
      %v90 = vsub.s32 32, %v89
      %v91 = vshrl.u32 683565275, %v90
      %v92 = vshll.u32 683565275, %v89
      %v93 = vshrl.u32 2475754826, %v90
      %v94 = vor.u32 %v92, %v93
      %v95 = vshll.u32 2475754826, %v89
      %v96 = vshrl.u32 2131351028, %v90
      %v97 = vor.u32 %v95, %v96
      %v98 = vshll.u32 2131351028, %v89
      %v99 = vshrl.u32 2102212464, %v90
      %v100 = vor.u32 %v98, %v99
      %v101 = vshll.u32 2102212464, %v89
      %v102 = vshrl.u32 920167782, %v90
      %v103 = vor.u32 %v101, %v102
      %v104 = vshll.u32 920167782, %v89
      %v105 = vshrl.u32 1326507024, %v90
      %v106 = vor.u32 %v104, %v105
      %vm107 = vcmp.lt.s32.totalorder %v88, 1
      %vm108 = vcmp.lt.s32.totalorder %v88, 2
      %vm109 = vcmp.lt.s32.totalorder %v88, 3
      %vm110 = vcmp.lt.s32.totalorder %v88, 4
      %v111 = vsel %vm107, %v91, %v94
      %v112 = vsel %vm110, %v100, 2102212464
      %v113 = vsel %vm109, %v97, %v112
      %v114 = vsel %vm108, %v111, %v113
      %v115 = vsel %vm107, %v94, %v97
      %v116 = vsel %vm110, %v103, 920167782
      %v117 = vsel %vm109, %v100, %v116
      %v118 = vsel %vm108, %v115, %v117
      %v119 = vsel %vm107, %v97, %v100
      %v120 = vsel %vm110, %v106, 1326507024
      %v121 = vsel %vm109, %v103, %v120
      %v122 = vsel %vm108, %v119, %v121
      %v123 = vshll.u32 %v83, 8
      %v124 = vand.u32 %v123, 65535
      %v125 = vshrl.u32 %v123, 16
      %v126 = vand.u32 %v122, 65535
      %v127 = vshrl.u32 %v122, 16
      %v128 = vmul.u32 %v124, %v126
      %v129 = vmul.u32 %v124, %v127
      %v130 = vmul.u32 %v125, %v126
      %v131 = vmul.u32 %v125, %v127
      %v132 = vshll.u32 %v129, 16
      %v133 = vshrl.u32 %v129, 16
      %v134 = vshll.u32 %v130, 16
      %v135 = vshrl.u32 %v130, 16
      %vm136 = vc.u32 %v128, %v132
      %v137 = vsel %vm136, 1, 0
      %v138 = vadd.s32 %v128, %v132
      %v139 = vadd.s32 %v131, %v137
      %vm140 = vc.u32 %v138, %v134
      %v141 = vsel %vm140, 1, 0
      %v142 = vadd.s32 %v138, %v134
      %v143 = vadd.s32 %v139, %v141
      %v144 = vadd.s32 %v143, %v133
      %v145 = vadd.s32 %v144, %v135
      %v146 = vand.u32 %v123, 65535
      %v147 = vshrl.u32 %v123, 16
      %v148 = vand.u32 %v118, 65535
      %v149 = vshrl.u32 %v118, 16
      %v150 = vmul.u32 %v146, %v148
      %v151 = vmul.u32 %v146, %v149
      %v152 = vmul.u32 %v147, %v148
      %v153 = vmul.u32 %v147, %v149
      %v154 = vshll.u32 %v151, 16
      %v155 = vshrl.u32 %v151, 16
      %v156 = vshll.u32 %v152, 16
      %v157 = vshrl.u32 %v152, 16
      %vm158 = vc.u32 %v150, %v154
      %v159 = vsel %vm158, 1, 0
      %v160 = vadd.s32 %v150, %v154
      %v161 = vadd.s32 %v153, %v159
      %vm162 = vc.u32 %v160, %v156
      %v163 = vsel %vm162, 1, 0
      %v164 = vadd.s32 %v160, %v156
      %v165 = vadd.s32 %v161, %v163
      %v166 = vadd.s32 %v165, %v155
      %v167 = vadd.s32 %v166, %v157
      %v168 = vmul.u32 %v123, %v114
      %v169 = vadd.s32 %v145, %v164
      %vm170 = vc.u32 %v145, %v164
      %v171 = vadd.s32 %v167, 1
      %v172 = vsel %vm170, %v171, %v167
      %v173 = vadd.s32 %v168, %v172
      %v174 = vadd.s32 %v173, 536870912
      %v175 = vshrl.u32 %v174, 30
      %v176 = vshll.u32 %v175, 30
      %v177 = vsub.s32 %v173, %v176
      %vm178 = vcmp.lt.s32.totalorder %v177, 0
      %v179 = vsub.s32 0, %v177
      %v180 = vsel %vm178, %v179, %v177
      %v181 = vclz %v180
      %v182 = vsub.s32 %v181, 2
      %vm183 = vcmp.gt.s32.totalorder 0, %v182
      %v184 = vsel %vm183, 0, %v182
      %v185 = vsub.s32 32, %v184
      %v186 = vshll.u32 %v177, %v184
      %v187 = vshrl.u32 %v169, %v185
      %v188 = vor.u32 %v186, %v187
      %v189 = vsub.s32 4294967266, %v184
      %v190 = vadd.s32 %v189, 127
      %v191 = vshll.u32 %v190, 23
      %v192 = vor.u32 4788187, %v191
      %v193 = vand.u32 2147483647, %v192
      %v195 = vcvt.s32.f32 %v188
      %v196 = vmul.f32 %v195, %v193
      %v197 = vxor.u32 %v196, 2147483648
      %v198 = vsel %vm77, %v197, %v196
      %v199 = vsub.s32 4, %v175
      %v200 = vsel %vm77, %v199, %v175
      %v201 = vsel %vm76, %v74, %v198
      %v202 = vsel %vm76, 0, %v200
      %v203 = vmul.f32 %v201, %v201
      %v204 = vmul.f32 %v203, -0.001358992
      %v205 = vadd.f32 %v204, 0.041655596
      %v206 = vmul.f32 %v203, %v205
      %v207 = vadd.f32 %v206, -0.4999988
      %v208 = vmul.f32 %v203, %v207
      %v209 = vadd.f32 1.0, %v208
      %v210 = vmul.f32 %v201, %v201
      %v211 = vmul.f32 %v210, -0.00019511016
      %v212 = vadd.f32 %v211, 0.008332121
      %v213 = vmul.f32 %v210, %v212
      %v214 = vadd.f32 %v213, -0.16666654
      %v215 = vmul.f32 %v210, %v214
      %v216 = vadd.f32 %v215, 1.0
      %v217 = vmul.f32 %v216, %v201
      %vm218 = vweird.f32 %v74
      %v219 = vadd.s32 %v202, 3
      %v220 = vand.u32 %v219, 3
      %vm221 = vcmp.lt.s32.totalorder %v220, 2
      %vm222 = vcmp.eq.s32.totalorder %v220, 0
      %v223 = vxor.u32 %v217, 2147483648
      %v224 = vsel %vm222, %v209, %v223
      %vm225 = vcmp.eq.s32.totalorder %v220, 2
      %v226 = vxor.u32 %v209, 2147483648
      %v227 = vsel %vm225, %v226, %v217
      %v228 = vsel %vm221, %v224, %v227
      %v229 = vsel %vm218, nan, %v228
      %v230 = vpack.c.bf16 %v229, %v229
      %v231 = vand.u32 2147483647, %v74
      %vm232 = vcmp.le.f32.partialorder %v231, 0.7853982
      %vm233 = vcmp.lt.s32.totalorder %v74, 0
      %v234 = vand.u32 %v74, 2139095040
      %v235 = vshrl.u32 %v234, 23
      %v236 = vsub.s32 %v235, 127
      %v237 = vand.u32 2147483647, %v74
      %v238 = vand.u32 %v237, 8388607
      %v239 = vor.u32 %v238, 8388608
      %v240 = vsub.s32 0, %v239
      %v241 = vadd.s32 %v236, 1
      %vm242 = vcmp.gt.s32.totalorder %v241, 0
      %v243 = vsel %vm242, %v241, 0
      %v244 = vshrl.u32 %v243, 5
      %v245 = vand.u32 %v243, 31
      %v246 = vsub.s32 32, %v245
      %v247 = vshrl.u32 683565275, %v246
      %v248 = vshll.u32 683565275, %v245
      %v249 = vshrl.u32 2475754826, %v246
      %v250 = vor.u32 %v248, %v249
      %v251 = vshll.u32 2475754826, %v245
      %v252 = vshrl.u32 2131351028, %v246
      %v253 = vor.u32 %v251, %v252
      %v254 = vshll.u32 2131351028, %v245
      %v255 = vshrl.u32 2102212464, %v246
      %v256 = vor.u32 %v254, %v255
      %v257 = vshll.u32 2102212464, %v245
      %v258 = vshrl.u32 920167782, %v246
      %v259 = vor.u32 %v257, %v258
      %v260 = vshll.u32 920167782, %v245
      %v261 = vshrl.u32 1326507024, %v246
      %v262 = vor.u32 %v260, %v261
      %vm263 = vcmp.lt.s32.totalorder %v244, 1
      %vm264 = vcmp.lt.s32.totalorder %v244, 2
      %vm265 = vcmp.lt.s32.totalorder %v244, 3
      %vm266 = vcmp.lt.s32.totalorder %v244, 4
      %v267 = vsel %vm263, %v247, %v250
      %v268 = vsel %vm266, %v256, 2102212464
      %v269 = vsel %vm265, %v253, %v268
      %v270 = vsel %vm264, %v267, %v269
      %v271 = vsel %vm263, %v250, %v253
      %v272 = vsel %vm266, %v259, 920167782
      %v273 = vsel %vm265, %v256, %v272
      %v274 = vsel %vm264, %v271, %v273
      %v275 = vsel %vm263, %v253, %v256
      %v276 = vsel %vm266, %v262, 1326507024
      %v277 = vsel %vm265, %v259, %v276
      %v278 = vsel %vm264, %v275, %v277
      %v279 = vshll.u32 %v239, 8
      %v280 = vand.u32 %v279, 65535
      %v281 = vshrl.u32 %v279, 16
      %v282 = vand.u32 %v278, 65535
      %v283 = vshrl.u32 %v278, 16
      %v284 = vmul.u32 %v280, %v282
      %v285 = vmul.u32 %v280, %v283
      %v286 = vmul.u32 %v281, %v282
      %v287 = vmul.u32 %v281, %v283
      %v288 = vshll.u32 %v285, 16
      %v289 = vshrl.u32 %v285, 16
      %v290 = vshll.u32 %v286, 16
      %v291 = vshrl.u32 %v286, 16
      %vm292 = vc.u32 %v284, %v288
      %v293 = vsel %vm292, 1, 0
      %v294 = vadd.s32 %v284, %v288
      %v295 = vadd.s32 %v287, %v293
      %vm296 = vc.u32 %v294, %v290
      %v297 = vsel %vm296, 1, 0
      %v298 = vadd.s32 %v294, %v290
      %v299 = vadd.s32 %v295, %v297
      %v300 = vadd.s32 %v299, %v289
      %v301 = vadd.s32 %v300, %v291
      %v302 = vand.u32 %v279, 65535
      %v303 = vshrl.u32 %v279, 16
      %v304 = vand.u32 %v274, 65535
      %v305 = vshrl.u32 %v274, 16
      %v306 = vmul.u32 %v302, %v304
      %v307 = vmul.u32 %v302, %v305
      %v308 = vmul.u32 %v303, %v304
      %v309 = vmul.u32 %v303, %v305
      %v310 = vshll.u32 %v307, 16
      %v311 = vshrl.u32 %v307, 16
      %v312 = vshll.u32 %v308, 16
      %v313 = vshrl.u32 %v308, 16
      %vm314 = vc.u32 %v306, %v310
      %v315 = vsel %vm314, 1, 0
      %v316 = vadd.s32 %v306, %v310
      %v317 = vadd.s32 %v309, %v315
      %vm318 = vc.u32 %v316, %v312
      %v319 = vsel %vm318, 1, 0
      %v320 = vadd.s32 %v316, %v312
      %v321 = vadd.s32 %v317, %v319
      %v322 = vadd.s32 %v321, %v311
      %v323 = vadd.s32 %v322, %v313
      %v324 = vmul.u32 %v279, %v270
      %v325 = vadd.s32 %v301, %v320
      %vm326 = vc.u32 %v301, %v320
      %v327 = vadd.s32 %v323, 1
      %v328 = vsel %vm326, %v327, %v323
      %v329 = vadd.s32 %v324, %v328
      %v330 = vadd.s32 %v329, 536870912
      %v331 = vshrl.u32 %v330, 30
      %v332 = vshll.u32 %v331, 30
      %v333 = vsub.s32 %v329, %v332
      %vm334 = vcmp.lt.s32.totalorder %v333, 0
      %v335 = vsub.s32 0, %v333
      %v336 = vsel %vm334, %v335, %v333
      %v337 = vclz %v336
      %v338 = vsub.s32 %v337, 2
      %vm339 = vcmp.gt.s32.totalorder 0, %v338
      %v340 = vsel %vm339, 0, %v338
      %v341 = vsub.s32 32, %v340
      %v342 = vshll.u32 %v333, %v340
      %v343 = vshrl.u32 %v325, %v341
      %v344 = vor.u32 %v342, %v343
      %v345 = vsub.s32 4294967266, %v340
      %v346 = vadd.s32 %v345, 127
      %v347 = vshll.u32 %v346, 23
      %v348 = vor.u32 4788187, %v347
      %v349 = vand.u32 2147483647, %v348
      %v351 = vcvt.s32.f32 %v344
      %v352 = vmul.f32 %v351, %v349
      %v353 = vxor.u32 %v352, 2147483648
      %v354 = vsel %vm233, %v353, %v352
      %v355 = vsub.s32 4, %v331
      %v356 = vsel %vm233, %v355, %v331
      %v357 = vsel %vm232, %v74, %v354
      %v358 = vsel %vm232, 0, %v356
      %v359 = vmul.f32 %v357, %v357
      %v360 = vmul.f32 %v359, -0.001358992
      %v361 = vadd.f32 %v360, 0.041655596
      %v362 = vmul.f32 %v359, %v361
      %v363 = vadd.f32 %v362, -0.4999988
      %v364 = vmul.f32 %v359, %v363
      %v365 = vadd.f32 1.0, %v364
      %v366 = vmul.f32 %v357, %v357
      %v367 = vmul.f32 %v366, -0.00019511016
      %v368 = vadd.f32 %v367, 0.008332121
      %v369 = vmul.f32 %v366, %v368
      %v370 = vadd.f32 %v369, -0.16666654
      %v371 = vmul.f32 %v366, %v370
      %v372 = vadd.f32 %v371, 1.0
      %v373 = vmul.f32 %v372, %v357
      %vm374 = vweird.f32 %v74
      %v375 = vand.u32 %v358, 3
      %vm376 = vcmp.lt.s32.totalorder %v375, 2
      %vm377 = vcmp.eq.s32.totalorder %v375, 0
      %v378 = vxor.u32 %v373, 2147483648
      %v379 = vsel %vm377, %v365, %v378
      %vm380 = vcmp.eq.s32.totalorder %v375, 2
      %v381 = vxor.u32 %v365, 2147483648
      %v382 = vsel %vm380, %v381, %v373
      %v383 = vsel %vm376, %v379, %v382
      %v384 = vsel %vm374, nan, %v383
      %v385 = vpack.c.bf16 %v384, %v384
      %v386 = vld [vmem:[#allocation3] sm:$0xf]
      %v387 = vld [vmem:[#allocation3 + $0x4] sm:$0xf]
      %v388 = vld [vmem:[#allocation3 + $0x8] sm:$0xf]
      %v389 = vld [vmem:[#allocation3 + $0xc] sm:$0xf]
      %v392 = vunpack.c.l.b16 %v388
      %v393 = vunpack.c.l.b16 %v389
      %v394 = vpack.c.b16 %v393, %v392
      %vm396 = vcmask 130048
      %v398 = vsel %vm396, %v385, 0
      %400 = vmatpush.bf16.msra.mxu0 0
      %401 = vmatpush.bf16.msra.mxu0 0
      %402 = vmatpush.bf16.msra.mxu0 0
      %403 = vmatpush.bf16.msra.mxu0 0
      %404 = vmatpush.bf16.msra.mxu0 0
      %405 = vmatpush.bf16.msra.mxu0 0
      %406 = vmatpush.bf16.msra.mxu0 0
      %407 = vmatpush.bf16.msra.mxu0 %v394
      %408 = vmatmul.bf16.gmra.mxu0 %v398
      %v409 = vpop.f32.mrf.mxu0
      %v410 = vadd.f32 0.0, %v409
      %v411 = vpop.f32.mrf.mxu0
      %412 = vdwg.mxu0
      %v415 = vunpack.c.l.b16 %v386
      %v416 = vunpack.c.l.b16 %v387
      %v417 = vpack.c.b16 %v416, %v415
      %v420 = vsel %vm396, %v230, 0
      %422 = vmatpush.bf16.msra.mxu0 0
      %423 = vmatpush.bf16.msra.mxu0 0
      %424 = vmatpush.bf16.msra.mxu0 0
      %425 = vmatpush.bf16.msra.mxu0 0
      %426 = vmatpush.bf16.msra.mxu0 0
      %427 = vmatpush.bf16.msra.mxu0 0
      %428 = vmatpush.bf16.msra.mxu0 0
      %429 = vmatpush.bf16.msra.mxu0 %v417
      %430 = vmatmul.bf16.gmra.mxu0 %v420
      %v431 = vpop.f32.mrf.mxu0
      %v432 = vadd.f32 %v410, %v431
      %v433 = vpop.f32.mrf.mxu0
      %434 = vdwg.mxu0
      %v435 = vld [vmem:[%s3] sm:$0x1]
      %v437 = vperm.slane %v435, 0
      %v439 = vadd.f32 %v432, %v437
      %v440 = vxor.u32 %v439, 2147483648
      %v441 = vmul.f32 %v440, 1.442695
      %v442 = vpow.pop %v441
      %v443 = vadd.f32 %v442, 1.0
      %v444 = vrcp.pop %v443
      %v445 = vmul.f32 %v443, %v444
      %v446 = vsub.f32 1.0, %v445
      %v447 = vmul.f32 %v444, %v446
      %v448 = vadd.f32 %v444, %v447
      %vm449 = vweird.f32 %v443
      %vm450 = vweird.f32 %v444
      %vm451 = vmor %vm449, %vm450
      %v452 = vsel %vm451, %v444, %v448
      %v453 = vand.u32 2147483647, %v443
      %vm454 = vcmp.eq.f32.partialorder %v453, 8.507059e+37
      %v455 = vand.u32 %v443, 2147483648
      %v456 = vor.u32 1.1754944e-38, %v455
      %v457 = vsel %vm454, %v456, %v452
      %v458 = vmul.f32 1.0, %v457
      %v459 = vmul.f32 %v439, %v458
      %vm460 = vcmask 261120
      %461 = vst.msk [vmem:[#allocation2] sm:$0xff] %vm460, %v459
    $region37: #{tpu_custom_call.1} parent=1 // pred_fallthru
      _
    %v462 = vld [vmem:[#allocation2] sm:$0xff]
    %v463 = vpack.c.bf16 %v462, %v462
    %v464 = vld [vmem:[#allocation6] sm:$0xf]
    %v465 = vld [vmem:[#allocation6 + $0x4] sm:$0xf]
    %v466 = vld [vmem:[#allocation6 + $0x8] sm:$0xf]
    %v467 = vld [vmem:[#allocation6 + $0xc] sm:$0xf]
    %v468 = vld [vmem:[%s5] sm:$0x1]
    %v470 = vperm.slane %v468, 0
    %v476 = vunpack.c.l.b16 %v464
    %v477 = vunpack.c.l.b16 %v465
    %v478 = vunpack.c.l.b16 %v466
    %v479 = vunpack.c.l.b16 %v467
    %v480 = vpack.c.b16 %v477, %v476
    %v481 = vpack.c.b16 %v479, %v478
    %vm484 = vcmask 261120
    %v486 = vsel %vm484, %v463, 0
    %488 = vmatpush.bf16.msra.mxu0 0
    %489 = vmatpush.bf16.msra.mxu0 0
    %490 = vmatpush.bf16.msra.mxu0 0
    %491 = vmatpush.bf16.msra.mxu0 0
    %492 = vmatpush.bf16.msra.mxu0 0
    %493 = vmatpush.bf16.msra.mxu0 0
    %494 = vmatpush.bf16.msra.mxu0 %v481
    %495 = vmatpush.bf16.msra.mxu0 %v480
    %496 = vmatmul.bf16.gmra.mxu0 %v486
    %v497 = vpop.f32.mrf.mxu0
    %v498 = vadd.f32 %v470, %v497
    %v499 = vpop.f32.mrf.mxu0
    %500 = vdwg.mxu0
    %501 = vst.msk [vmem:[#allocation8] sm:$0xff] %vm484, %v498
    // Predicated region
    $region38: #{tpu_custom_call.1} parent=1 // pred_check
      _
    $region39: #{tpu_custom_call.1} parent=1 // pred_check_branch
      %503 = sbr.rel (0) target = $region41
    $region40: #{tpu_custom_call.1} parent=1 // pred_region
      %505 = vsyncadd [#allocation5], 0
      %s507 = sshll.u32 [#allocation8], 4
      %s508 = int_to_ptr.vmem [resolvable:$true] %s507
      %s509 = sshll.u32 %s6, 4
      %s510 = int_to_ptr.hbm [resolvable:$true] %s509
      %512 = dma.vmem_to_hbm [thread:$0]  %s508, 128, %s510, [#allocation5]
    $region41: #{tpu_custom_call.1} parent=1 // pred_fallthru
      _
    // Predicated region
    $region42: #{tpu_custom_call.1} parent=1 // pred_check
      _
    $region43: #{tpu_custom_call.1} parent=1 // pred_check_branch
      %514 = sbr.rel (0) target = $region45
    $region44: #{tpu_custom_call.1} parent=1 // pred_region
      %516 = dma.done [#allocation5], 128
    $region45: #{tpu_custom_call.1} parent=1 // pred_fallthru
      _
    %517 = vsyncpa [#allocation4], 1
    %518 = vsyncpa [#allocation7], 1
    %519 = vsyncpa [#allocation5], 1

// kernel: tpu_custom_call.1
$region0: #{tpu_custom_call.1}
  #allocation0 [shape = 'u32[]', space=smem, size = 0x4, offset = 0x4, fixed_abs, tag = 'smem constant byte address 0x4 - core index']
  #allocation1 [shape = 'u32[72,128]{1,0:T(1,128)}', space=vmem, size = 0x9000, scoped, tag = 'internal scratch']
  #allocation2 [shape = 'f32[8,32]{1,0:T(8,128)}', space=vmem, size = 0x1000, scoped, tag = 'scratch operand']
  %s0 = inlined_call_operand.vmem [shape: f32[8,1], index: 0, kind: input, shape index: {}]
  %s1 = inlined_call_operand.vmem [shape: f32[1,16], index: 1, kind: input, shape index: {}]
  %s2 = inlined_call_operand.hbm [shape: bf16[32,32], index: 2, kind: input, shape index: {}]
  %s3 = inlined_call_operand.vmem [shape: f32[1,32], index: 3, kind: input, shape index: {}]
  %s4 = inlined_call_operand.hbm [shape: bf16[32,32], index: 4, kind: input, shape index: {}]
  %s5 = inlined_call_operand.vmem [shape: f32[1,32], index: 5, kind: input, shape index: {}]
  %s6 = inlined_call_operand.hbm [shape: f32[8,32], index: 6, kind: output, shape index: {}]
  %s7 = sld [smem:[#allocation0]]
  $region46: #{tpu_custom_call.1} parent=0
    _
  %s9 = ssub.s32 1, %s7
  %s10 = scalar_select 0, %s9, %s7
  $region1: #{tpu_custom_call.1} parent=0
    #allocation3 [shape = 'u8[8192]{0}', space=vmem, size = 0x2000, scoped, tag = 'input window, operand 2, single buffered']
    #allocation4 [shape = 's32[1]{0}', space=sflag, size = 0x4, scoped, tag = 'scoped memory for tpu_custom_call.1']
    #allocation5 [shape = 's32[1]{0}', space=sflag, size = 0x4, scoped, tag = 'scoped memory for tpu_custom_call.1']
    #allocation6 [shape = 'u8[8192]{0}', space=vmem, size = 0x2000, scoped, tag = 'input window, operand 4, single buffered']
    #allocation7 [shape = 's32[1]{0}', space=sflag, size = 0x4, scoped, tag = 'scoped memory for tpu_custom_call.1']
    #allocation8 [shape = 'u8[4096]{0}', space=vmem, size = 0x1000, scoped, tag = 'output window, operand 0, single buffered']
    %11 = vsyncpa [#allocation4], 0
    %12 = vsyncpa [#allocation7], 0
    %13 = vsyncpa [#allocation5], 0
    // Predicated region
    $region2: #{tpu_custom_call.1} parent=1 // pred_check
      _
    $region3: #{tpu_custom_call.1} parent=1 // pred_check_branch
      %15 = sbr.rel (0) target = $region5
    $region4: #{tpu_custom_call.1} parent=1 // pred_region
      _
    $region5: #{tpu_custom_call.1} parent=1 // pred_fallthru
      _
    // Predicated region
    $region6: #{tpu_custom_call.1} parent=1 // pred_check
      _
    $region7: #{tpu_custom_call.1} parent=1 // pred_check_branch
      %17 = sbr.rel (0) target = $region9
    $region8: #{tpu_custom_call.1} parent=1 // pred_region
      _
    $region9: #{tpu_custom_call.1} parent=1 // pred_fallthru
      _
    // Predicated region
    $region10: #{tpu_custom_call.1} parent=1 // pred_check
      _
    $region11: #{tpu_custom_call.1} parent=1 // pred_check_branch
      %19 = sbr.rel (0) target = $region13
    $region12: #{tpu_custom_call.1} parent=1 // pred_region
      %21 = vsyncadd [#allocation4], 0
      %s22 = sshll.u32 %s2, 4
      %s23 = int_to_ptr.hbm [resolvable:$true] %s22
      %s24 = sshll.u32 [#allocation3], 4
      %s25 = int_to_ptr.vmem [resolvable:$true] %s24
      %30 = dma.hbm_to_vmem [thread:$0]  %s23, 256, %s25, [#allocation4], 64, 64, 4
    $region13: #{tpu_custom_call.1} parent=1 // pred_fallthru
      _
    // Predicated region
    $region14: #{tpu_custom_call.1} parent=1 // pred_check
      _
    $region15: #{tpu_custom_call.1} parent=1 // pred_check_branch
      %32 = sbr.rel (0) target = $region17
    $region16: #{tpu_custom_call.1} parent=1 // pred_region
      _
    $region17: #{tpu_custom_call.1} parent=1 // pred_fallthru
      _
    // Predicated region
    $region18: #{tpu_custom_call.1} parent=1 // pred_check
      _
    $region19: #{tpu_custom_call.1} parent=1 // pred_check_branch
      %34 = sbr.rel (0) target = $region21
    $region20: #{tpu_custom_call.1} parent=1 // pred_region
      %36 = vsyncadd [#allocation7], 0
      %s37 = sshll.u32 %s4, 4
      %s38 = int_to_ptr.hbm [resolvable:$true] %s37
      %s39 = sshll.u32 [#allocation6], 4
      %s40 = int_to_ptr.vmem [resolvable:$true] %s39
      %45 = dma.hbm_to_vmem [thread:$0]  %s38, 256, %s40, [#allocation7], 64, 64, 4
    $region21: #{tpu_custom_call.1} parent=1 // pred_fallthru
      _
    // Predicated region
    $region22: #{tpu_custom_call.1} parent=1 // pred_check
      _
    $region23: #{tpu_custom_call.1} parent=1 // pred_check_branch
      %47 = sbr.rel (0) target = $region25
    $region24: #{tpu_custom_call.1} parent=1 // pred_region
      _
    $region25: #{tpu_custom_call.1} parent=1 // pred_fallthru
      _
    // Predicated region
    $region26: #{tpu_custom_call.1} parent=1 // pred_check
      _
    $region27: #{tpu_custom_call.1} parent=1 // pred_check_branch
      %49 = sbr.rel (0) target = $region29
    $region28: #{tpu_custom_call.1} parent=1 // pred_region
      %51 = dma.done [#allocation4], 256
    $region29: #{tpu_custom_call.1} parent=1 // pred_fallthru
      _
    // Predicated region
    $region30: #{tpu_custom_call.1} parent=1 // pred_check
      _
    $region31: #{tpu_custom_call.1} parent=1 // pred_check_branch
      %53 = sbr.rel (0) target = $region33
    $region32: #{tpu_custom_call.1} parent=1 // pred_region
      %55 = dma.done [#allocation7], 256
    $region33: #{tpu_custom_call.1} parent=1 // pred_fallthru
      _
    %p57 = scmp.eq.s32.totalorder 0, 0
    // Predicated region
    $region34: #{tpu_custom_call.1} parent=1 // pred_check
      %p58 = pneg %p57
    $region35: #{tpu_custom_call.1} parent=1 // pred_check_branch
      %60 = sbr.rel (%p58) target = $region37
    $region36: #{tpu_custom_call.1} parent=1 // pred_region
      %v61 = vld [vmem:[%s0] sm:$0xff]
      %v62 = vmax.f32 %v61, 0.0
      %v63 = vmin.f32 %v62, 4.0
      %v64 = vmul.f32 %v63, 0.25
      %v65 = vld [vmem:[%s1] sm:$0x1]
      %67 = vset.pattern.permute.xlu0 0
      %68 = vperm.xlu0 %67, %v64
      %v69 = vpop.permute.xlu0 %68
      %v72 = vperm.slane %v65, 0
      %v74 = vmul.f32 %v69, %v72
      %v75 = vand.u32 2147483647, %v74
      %vm76 = vcmp.le.f32.partialorder %v75, 0.7853982
      %vm77 = vcmp.lt.s32.totalorder %v74, 0
      %v78 = vand.u32 %v74, 2139095040
      %v79 = vshrl.u32 %v78, 23
      %v80 = vsub.s32 %v79, 127
      %v81 = vand.u32 2147483647, %v74
      %v82 = vand.u32 %v81, 8388607
      %v83 = vor.u32 %v82, 8388608
      %v84 = vsub.s32 0, %v83
      %v85 = vadd.s32 %v80, 1
      %vm86 = vcmp.gt.s32.totalorder %v85, 0
      %v87 = vsel %vm86, %v85, 0
      %v88 = vshrl.u32 %v87, 5
      %v89 = vand.u32 %v87, 31
      %v90 = vsub.s32 32, %v89
      %v91 = vshrl.u32 683565275, %v90
      %v92 = vshll.u32 683565275, %v89
      %v93 = vshrl.u32 2475754826, %v90
      %v94 = vor.u32 %v92, %v93
      %v95 = vshll.u32 2475754826, %v89
      %v96 = vshrl.u32 2131351028, %v90
      %v97 = vor.u32 %v95, %v96
      %v98 = vshll.u32 2131351028, %v89
      %v99 = vshrl.u32 2102212464, %v90
      %v100 = vor.u32 %v98, %v99
      %v101 = vshll.u32 2102212464, %v89
      %v102 = vshrl.u32 920167782, %v90
      %v103 = vor.u32 %v101, %v102
      %v104 = vshll.u32 920167782, %v89
      %v105 = vshrl.u32 1326507024, %v90
      %v106 = vor.u32 %v104, %v105
      %vm107 = vcmp.lt.s32.totalorder %v88, 1
      %vm108 = vcmp.lt.s32.totalorder %v88, 2
      %vm109 = vcmp.lt.s32.totalorder %v88, 3
      %vm110 = vcmp.lt.s32.totalorder %v88, 4
      %v111 = vsel %vm107, %v91, %v94
      %v112 = vsel %vm110, %v100, 2102212464
      %v113 = vsel %vm109, %v97, %v112
      %v114 = vsel %vm108, %v111, %v113
      %v115 = vsel %vm107, %v94, %v97
      %v116 = vsel %vm110, %v103, 920167782
      %v117 = vsel %vm109, %v100, %v116
      %v118 = vsel %vm108, %v115, %v117
      %v119 = vsel %vm107, %v97, %v100
      %v120 = vsel %vm110, %v106, 1326507024
      %v121 = vsel %vm109, %v103, %v120
      %v122 = vsel %vm108, %v119, %v121
      %v123 = vshll.u32 %v83, 8
      %v124 = vand.u32 %v123, 65535
      %v125 = vshrl.u32 %v123, 16
      %v126 = vand.u32 %v122, 65535
      %v127 = vshrl.u32 %v122, 16
      %v128 = vmul.u32 %v124, %v126
      %v129 = vmul.u32 %v124, %v127
      %v130 = vmul.u32 %v125, %v126
      %v131 = vmul.u32 %v125, %v127
      %v132 = vshll.u32 %v129, 16
      %v133 = vshrl.u32 %v129, 16
      %v134 = vshll.u32 %v130, 16
      %v135 = vshrl.u32 %v130, 16
      %vm136 = vc.u32 %v128, %v132
      %v137 = vsel %vm136, 1, 0
      %v138 = vadd.s32 %v128, %v132
      %v139 = vadd.s32 %v131, %v137
      %vm140 = vc.u32 %v138, %v134
      %v141 = vsel %vm140, 1, 0
      %v142 = vadd.s32 %v138, %v134
      %v143 = vadd.s32 %v139, %v141
      %v144 = vadd.s32 %v143, %v133
      %v145 = vadd.s32 %v144, %v135
      %v146 = vand.u32 %v123, 65535
      %v147 = vshrl.u32 %v123, 16
      %v148 = vand.u32 %v118, 65535
      %v149 = vshrl.u32 %v118, 16
      %v150 = vmul.u32 %v146, %v148
      %v151 = vmul.u32 %v146, %v149
      %v152 = vmul.u32 %v147, %v148
      %v153 = vmul.u32 %v147, %v149
      %v154 = vshll.u32 %v151, 16
      %v155 = vshrl.u32 %v151, 16
      %v156 = vshll.u32 %v152, 16
      %v157 = vshrl.u32 %v152, 16
      %vm158 = vc.u32 %v150, %v154
      %v159 = vsel %vm158, 1, 0
      %v160 = vadd.s32 %v150, %v154
      %v161 = vadd.s32 %v153, %v159
      %vm162 = vc.u32 %v160, %v156
      %v163 = vsel %vm162, 1, 0
      %v164 = vadd.s32 %v160, %v156
      %v165 = vadd.s32 %v161, %v163
      %v166 = vadd.s32 %v165, %v155
      %v167 = vadd.s32 %v166, %v157
      %v168 = vmul.u32 %v123, %v114
      %v169 = vadd.s32 %v145, %v164
      %vm170 = vc.u32 %v145, %v164
      %v171 = vadd.s32 %v167, 1
      %v172 = vsel %vm170, %v171, %v167
      %v173 = vadd.s32 %v168, %v172
      %v174 = vadd.s32 %v173, 536870912
      %v175 = vshrl.u32 %v174, 30
      %v176 = vshll.u32 %v175, 30
      %v177 = vsub.s32 %v173, %v176
      %vm178 = vcmp.lt.s32.totalorder %v177, 0
      %v179 = vsub.s32 0, %v177
      %v180 = vsel %vm178, %v179, %v177
      %v181 = vclz %v180
      %v182 = vsub.s32 %v181, 2
      %vm183 = vcmp.gt.s32.totalorder 0, %v182
      %v184 = vsel %vm183, 0, %v182
      %v185 = vsub.s32 32, %v184
      %v186 = vshll.u32 %v177, %v184
      %v187 = vshrl.u32 %v169, %v185
      %v188 = vor.u32 %v186, %v187
      %v189 = vsub.s32 4294967266, %v184
      %v190 = vadd.s32 %v189, 127
      %v191 = vshll.u32 %v190, 23
      %v192 = vor.u32 4788187, %v191
      %v193 = vand.u32 2147483647, %v192
      %v195 = vcvt.s32.f32 %v188
      %v196 = vmul.f32 %v195, %v193
      %v197 = vxor.u32 %v196, 2147483648
      %v198 = vsel %vm77, %v197, %v196
      %v199 = vsub.s32 4, %v175
      %v200 = vsel %vm77, %v199, %v175
      %v201 = vsel %vm76, %v74, %v198
      %v202 = vsel %vm76, 0, %v200
      %v203 = vmul.f32 %v201, %v201
      %v204 = vmul.f32 %v203, -0.001358992
      %v205 = vadd.f32 %v204, 0.041655596
      %v206 = vmul.f32 %v203, %v205
      %v207 = vadd.f32 %v206, -0.4999988
      %v208 = vmul.f32 %v203, %v207
      %v209 = vadd.f32 1.0, %v208
      %v210 = vmul.f32 %v201, %v201
      %v211 = vmul.f32 %v210, -0.00019511016
      %v212 = vadd.f32 %v211, 0.008332121
      %v213 = vmul.f32 %v210, %v212
      %v214 = vadd.f32 %v213, -0.16666654
      %v215 = vmul.f32 %v210, %v214
      %v216 = vadd.f32 %v215, 1.0
      %v217 = vmul.f32 %v216, %v201
      %vm218 = vweird.f32 %v74
      %v219 = vadd.s32 %v202, 3
      %v220 = vand.u32 %v219, 3
      %vm221 = vcmp.lt.s32.totalorder %v220, 2
      %vm222 = vcmp.eq.s32.totalorder %v220, 0
      %v223 = vxor.u32 %v217, 2147483648
      %v224 = vsel %vm222, %v209, %v223
      %vm225 = vcmp.eq.s32.totalorder %v220, 2
      %v226 = vxor.u32 %v209, 2147483648
      %v227 = vsel %vm225, %v226, %v217
      %v228 = vsel %vm221, %v224, %v227
      %v229 = vsel %vm218, nan, %v228
      %v230 = vpack.c.bf16 %v229, %v229
      %v231 = vand.u32 2147483647, %v74
      %vm232 = vcmp.le.f32.partialorder %v231, 0.7853982
      %vm233 = vcmp.lt.s32.totalorder %v74, 0
      %v234 = vand.u32 %v74, 2139095040
      %v235 = vshrl.u32 %v234, 23
      %v236 = vsub.s32 %v235, 127
      %v237 = vand.u32 2147483647, %v74
      %v238 = vand.u32 %v237, 8388607
      %v239 = vor.u32 %v238, 8388608
      %v240 = vsub.s32 0, %v239
      %v241 = vadd.s32 %v236, 1
      %vm242 = vcmp.gt.s32.totalorder %v241, 0
      %v243 = vsel %vm242, %v241, 0
      %v244 = vshrl.u32 %v243, 5
      %v245 = vand.u32 %v243, 31
      %v246 = vsub.s32 32, %v245
      %v247 = vshrl.u32 683565275, %v246
      %v248 = vshll.u32 683565275, %v245
      %v249 = vshrl.u32 2475754826, %v246
      %v250 = vor.u32 %v248, %v249
      %v251 = vshll.u32 2475754826, %v245
      %v252 = vshrl.u32 2131351028, %v246
      %v253 = vor.u32 %v251, %v252
      %v254 = vshll.u32 2131351028, %v245
      %v255 = vshrl.u32 2102212464, %v246
      %v256 = vor.u32 %v254, %v255
      %v257 = vshll.u32 2102212464, %v245
      %v258 = vshrl.u32 920167782, %v246
      %v259 = vor.u32 %v257, %v258
      %v260 = vshll.u32 920167782, %v245
      %v261 = vshrl.u32 1326507024, %v246
      %v262 = vor.u32 %v260, %v261
      %vm263 = vcmp.lt.s32.totalorder %v244, 1
      %vm264 = vcmp.lt.s32.totalorder %v244, 2
      %vm265 = vcmp.lt.s32.totalorder %v244, 3
      %vm266 = vcmp.lt.s32.totalorder %v244, 4
      %v267 = vsel %vm263, %v247, %v250
      %v268 = vsel %vm266, %v256, 2102212464
      %v269 = vsel %vm265, %v253, %v268
      %v270 = vsel %vm264, %v267, %v269
      %v271 = vsel %vm263, %v250, %v253
      %v272 = vsel %vm266, %v259, 920167782
      %v273 = vsel %vm265, %v256, %v272
      %v274 = vsel %vm264, %v271, %v273
      %v275 = vsel %vm263, %v253, %v256
      %v276 = vsel %vm266, %v262, 1326507024
      %v277 = vsel %vm265, %v259, %v276
      %v278 = vsel %vm264, %v275, %v277
      %v279 = vshll.u32 %v239, 8
      %v280 = vand.u32 %v279, 65535
      %v281 = vshrl.u32 %v279, 16
      %v282 = vand.u32 %v278, 65535
      %v283 = vshrl.u32 %v278, 16
      %v284 = vmul.u32 %v280, %v282
      %v285 = vmul.u32 %v280, %v283
      %v286 = vmul.u32 %v281, %v282
      %v287 = vmul.u32 %v281, %v283
      %v288 = vshll.u32 %v285, 16
      %v289 = vshrl.u32 %v285, 16
      %v290 = vshll.u32 %v286, 16
      %v291 = vshrl.u32 %v286, 16
      %vm292 = vc.u32 %v284, %v288
      %v293 = vsel %vm292, 1, 0
      %v294 = vadd.s32 %v284, %v288
      %v295 = vadd.s32 %v287, %v293
      %vm296 = vc.u32 %v294, %v290
      %v297 = vsel %vm296, 1, 0
      %v298 = vadd.s32 %v294, %v290
      %v299 = vadd.s32 %v295, %v297
      %v300 = vadd.s32 %v299, %v289
      %v301 = vadd.s32 %v300, %v291
      %v302 = vand.u32 %v279, 65535
      %v303 = vshrl.u32 %v279, 16
      %v304 = vand.u32 %v274, 65535
      %v305 = vshrl.u32 %v274, 16
      %v306 = vmul.u32 %v302, %v304
      %v307 = vmul.u32 %v302, %v305
      %v308 = vmul.u32 %v303, %v304
      %v309 = vmul.u32 %v303, %v305
      %v310 = vshll.u32 %v307, 16
      %v311 = vshrl.u32 %v307, 16
      %v312 = vshll.u32 %v308, 16
      %v313 = vshrl.u32 %v308, 16
      %vm314 = vc.u32 %v306, %v310
      %v315 = vsel %vm314, 1, 0
      %v316 = vadd.s32 %v306, %v310
      %v317 = vadd.s32 %v309, %v315
      %vm318 = vc.u32 %v316, %v312
      %v319 = vsel %vm318, 1, 0
      %v320 = vadd.s32 %v316, %v312
      %v321 = vadd.s32 %v317, %v319
      %v322 = vadd.s32 %v321, %v311
      %v323 = vadd.s32 %v322, %v313
      %v324 = vmul.u32 %v279, %v270
      %v325 = vadd.s32 %v301, %v320
      %vm326 = vc.u32 %v301, %v320
      %v327 = vadd.s32 %v323, 1
      %v328 = vsel %vm326, %v327, %v323
      %v329 = vadd.s32 %v324, %v328
      %v330 = vadd.s32 %v329, 536870912
      %v331 = vshrl.u32 %v330, 30
      %v332 = vshll.u32 %v331, 30
      %v333 = vsub.s32 %v329, %v332
      %vm334 = vcmp.lt.s32.totalorder %v333, 0
      %v335 = vsub.s32 0, %v333
      %v336 = vsel %vm334, %v335, %v333
      %v337 = vclz %v336
      %v338 = vsub.s32 %v337, 2
      %vm339 = vcmp.gt.s32.totalorder 0, %v338
      %v340 = vsel %vm339, 0, %v338
      %v341 = vsub.s32 32, %v340
      %v342 = vshll.u32 %v333, %v340
      %v343 = vshrl.u32 %v325, %v341
      %v344 = vor.u32 %v342, %v343
      %v345 = vsub.s32 4294967266, %v340
      %v346 = vadd.s32 %v345, 127
      %v347 = vshll.u32 %v346, 23
      %v348 = vor.u32 4788187, %v347
      %v349 = vand.u32 2147483647, %v348
      %v351 = vcvt.s32.f32 %v344
      %v352 = vmul.f32 %v351, %v349
      %v353 = vxor.u32 %v352, 2147483648
      %v354 = vsel %vm233, %v353, %v352
      %v355 = vsub.s32 4, %v331
      %v356 = vsel %vm233, %v355, %v331
      %v357 = vsel %vm232, %v74, %v354
      %v358 = vsel %vm232, 0, %v356
      %v359 = vmul.f32 %v357, %v357
      %v360 = vmul.f32 %v359, -0.001358992
      %v361 = vadd.f32 %v360, 0.041655596
      %v362 = vmul.f32 %v359, %v361
      %v363 = vadd.f32 %v362, -0.4999988
      %v364 = vmul.f32 %v359, %v363
      %v365 = vadd.f32 1.0, %v364
      %v366 = vmul.f32 %v357, %v357
      %v367 = vmul.f32 %v366, -0.00019511016
      %v368 = vadd.f32 %v367, 0.008332121
      %v369 = vmul.f32 %v366, %v368
      %v370 = vadd.f32 %v369, -0.16666654
      %v371 = vmul.f32 %v366, %v370
      %v372 = vadd.f32 %v371, 1.0
      %v373 = vmul.f32 %v372, %v357
      %vm374 = vweird.f32 %v74
      %v375 = vand.u32 %v358, 3
      %vm376 = vcmp.lt.s32.totalorder %v375, 2
      %vm377 = vcmp.eq.s32.totalorder %v375, 0
      %v378 = vxor.u32 %v373, 2147483648
      %v379 = vsel %vm377, %v365, %v378
      %vm380 = vcmp.eq.s32.totalorder %v375, 2
      %v381 = vxor.u32 %v365, 2147483648
      %v382 = vsel %vm380, %v381, %v373
      %v383 = vsel %vm376, %v379, %v382
      %v384 = vsel %vm374, nan, %v383
      %v385 = vpack.c.bf16 %v384, %v384
      %v386 = vld [vmem:[#allocation3] sm:$0xf]
      %v387 = vld [vmem:[#allocation3 + $0x4] sm:$0xf]
      %v388 = vld [vmem:[#allocation3 + $0x8] sm:$0xf]
      %v389 = vld [vmem:[#allocation3 + $0xc] sm:$0xf]
      %v392 = vunpack.c.l.b16 %v388
      %v393 = vunpack.c.l.b16 %v389
      %v394 = vpack.c.b16 %v393, %v392
      %vm396 = vcmask 130048
      %v398 = vsel %vm396, %v385, 0
      %400 = vmatpush.bf16.msra.mxu0 0
      %401 = vmatpush.bf16.msra.mxu0 0
      %402 = vmatpush.bf16.msra.mxu0 0
      %403 = vmatpush.bf16.msra.mxu0 0
      %404 = vmatpush.bf16.msra.mxu0 0
      %405 = vmatpush.bf16.msra.mxu0 0
      %406 = vmatpush.bf16.msra.mxu0 0
      %407 = vmatpush.bf16.msra.mxu0 %v394
      %408 = vmatmul.bf16.gmra.mxu0 %v398
      %v409 = vpop.f32.mrf.mxu0
      %v410 = vadd.f32 0.0, %v409
      %v411 = vpop.f32.mrf.mxu0
      %412 = vdwg.mxu0
      %v415 = vunpack.c.l.b16 %v386
      %v416 = vunpack.c.l.b16 %v387
      %v417 = vpack.c.b16 %v416, %v415
      %v420 = vsel %vm396, %v230, 0
      %422 = vmatpush.bf16.msra.mxu0 0
      %423 = vmatpush.bf16.msra.mxu0 0
      %424 = vmatpush.bf16.msra.mxu0 0
      %425 = vmatpush.bf16.msra.mxu0 0
      %426 = vmatpush.bf16.msra.mxu0 0
      %427 = vmatpush.bf16.msra.mxu0 0
      %428 = vmatpush.bf16.msra.mxu0 0
      %429 = vmatpush.bf16.msra.mxu0 %v417
      %430 = vmatmul.bf16.gmra.mxu0 %v420
      %v431 = vpop.f32.mrf.mxu0
      %v432 = vadd.f32 %v410, %v431
      %v433 = vpop.f32.mrf.mxu0
      %434 = vdwg.mxu0
      %v435 = vld [vmem:[%s3] sm:$0x1]
      %v437 = vperm.slane %v435, 0
      %v439 = vadd.f32 %v432, %v437
      %v440 = vxor.u32 %v439, 2147483648
      %v441 = vmul.f32 %v440, 1.442695
      %v442 = vpow.pop %v441
      %v443 = vadd.f32 %v442, 1.0
      %v444 = vrcp.pop %v443
      %v445 = vmul.f32 %v443, %v444
      %v446 = vsub.f32 1.0, %v445
      %v447 = vmul.f32 %v444, %v446
      %v448 = vadd.f32 %v444, %v447
      %vm449 = vweird.f32 %v443
      %vm450 = vweird.f32 %v444
      %vm451 = vmor %vm449, %vm450
      %v452 = vsel %vm451, %v444, %v448
      %v453 = vand.u32 2147483647, %v443
      %vm454 = vcmp.eq.f32.partialorder %v453, 8.507059e+37
      %v455 = vand.u32 %v443, 2147483648
      %v456 = vor.u32 1.1754944e-38, %v455
      %v457 = vsel %vm454, %v456, %v452
      %v458 = vmul.f32 1.0, %v457
      %v459 = vmul.f32 %v439, %v458
      %vm460 = vcmask 261120
      %461 = vst.msk [vmem:[#allocation2] sm:$0xff] %vm460, %v459
    $region37: #{tpu_custom_call.1} parent=1 // pred_fallthru
      _
    %v462 = vld [vmem:[#allocation2] sm:$0xff]
    %v463 = vpack.c.bf16 %v462, %v462
    %v464 = vld [vmem:[#allocation6] sm:$0xf]
    %v465 = vld [vmem:[#allocation6 + $0x4] sm:$0xf]
    %v466 = vld [vmem:[#allocation6 + $0x8] sm:$0xf]
    %v467 = vld [vmem:[#allocation6 + $0xc] sm:$0xf]
    %v468 = vld [vmem:[%s5] sm:$0x1]
    %v470 = vperm.slane %v468, 0
    %v476 = vunpack.c.l.b16 %v464
    %v477 = vunpack.c.l.b16 %v465
    %v478 = vunpack.c.l.b16 %v466
    %v479 = vunpack.c.l.b16 %v467
    %v480 = vpack.c.b16 %v477, %v476
    %v481 = vpack.c.b16 %v479, %v478
    %vm484 = vcmask 261120
    %v486 = vsel %vm484, %v463, 0
    %488 = vmatpush.bf16.msra.mxu0 0
    %489 = vmatpush.bf16.msra.mxu0 0
    %490 = vmatpush.bf16.msra.mxu0 0
    %491 = vmatpush.bf16.msra.mxu0 0
    %492 = vmatpush.bf16.msra.mxu0 0
    %493 = vmatpush.bf16.msra.mxu0 0
    %494 = vmatpush.bf16.msra.mxu0 %v481
    %495 = vmatpush.bf16.msra.mxu0 %v480
    %496 = vmatmul.bf16.gmra.mxu0 %v486
    %v497 = vpop.f32.mrf.mxu0
    %v498 = vadd.f32 %v470, %v497
    %v499 = vpop.f32.mrf.mxu0
    %500 = vdwg.mxu0
    %501 = vst.msk [vmem:[#allocation8] sm:$0xff] %vm484, %v498
    // Predicated region
    $region38: #{tpu_custom_call.1} parent=1 // pred_check
      _
    $region39: #{tpu_custom_call.1} parent=1 // pred_check_branch
      %503 = sbr.rel (0) target = $region41
    $region40: #{tpu_custom_call.1} parent=1 // pred_region
      %505 = vsyncadd [#allocation5], 0
      %s507 = sshll.u32 [#allocation8], 4
      %s508 = int_to_ptr.vmem [resolvable:$true] %s507
      %s509 = sshll.u32 %s6, 4
      %s510 = int_to_ptr.hbm [resolvable:$true] %s509
      %512 = dma.vmem_to_hbm [thread:$0]  %s508, 128, %s510, [#allocation5]
    $region41: #{tpu_custom_call.1} parent=1 // pred_fallthru
      _
    // Predicated region
    $region42: #{tpu_custom_call.1} parent=1 // pred_check
      _
    $region43: #{tpu_custom_call.1} parent=1 // pred_check_branch
      %514 = sbr.rel (0) target = $region45
    $region44: #{tpu_custom_call.1} parent=1 // pred_region
      %516 = dma.done [#allocation5], 128
    $region45: #{tpu_custom_call.1} parent=1 // pred_fallthru
      _
    %517 = vsyncpa [#allocation4], 1
    %518 = vsyncpa [#allocation7], 1
    %519 = vsyncpa [#allocation5], 1

</llo_original>
